<compile_context>
chip_gen: v7x
topology: tpu7x:2x2x1
jax: 0.10.0
libtpu: 0.0.40
codegen_flags: <defaults>
</compile_context>

<pallas_src>
import functools
import math

import jax
import jax.numpy as jnp
from jax.experimental import pallas as pl
from jax.experimental.pallas import tpu as pltpu

NUM_BITS = 8
CLAMP_HI = float(2 ** NUM_BITS)        # clamp(x, 0, 256)
LEVEL = float(2 ** NUM_BITS - 1)       # 255 quantization levels
EPS = 1e-8

LANE = 512                             # lane-dense flat width (multiple of 128)
TARGET_BLOCK_BYTES = 2 * 1024 * 1024   # ~2 MiB per input block in the tiled path
FUSED_MAX_F32_BYTES = 4 * 1024 * 1024  # fused single-block path threshold
VMEM_LIMIT = 32 * 1024 * 1024          # explicit scoped-VMEM budget (safe on v5e/v6e/v7x)


# ---------------------------------------------------------------------------
# Fused path: whole (padded) tensor resident in VMEM -> clamp, min/max,
# fake-quant and store in a single kernel (one HBM read instead of two).
# ---------------------------------------------------------------------------
def _fused_kernel(x_ref, o_ref, *, total, rows, lanes):
    x = x_ref[...].astype(jnp.float32)
    xc = jnp.clip(x, 0.0, CLAMP_HI)
    if rows * lanes != total:
        # Exclude padded tail elements from the global min/max.
        r = jax.lax.broadcasted_iota(jnp.int32, (rows, lanes), 0)
        c = jax.lax.broadcasted_iota(jnp.int32, (rows, lanes), 1)
        valid = (r * lanes + c) < total
        a = jnp.min(jnp.where(valid, xc, jnp.inf))
        b = jnp.max(jnp.where(valid, xc, -jnp.inf))
    else:
        a = jnp.min(xc)
        b = jnp.max(xc)
    s = jnp.maximum((b - a) / LEVEL, EPS)
    inv_s = 1.0 / s                                        # exact reciprocal
    q = jnp.round((jnp.clip(xc, a, b) - a) * inv_s) * s + a
    o_ref[...] = q.astype(o_ref.dtype)


# ---------------------------------------------------------------------------
# Pass 1 (large tensors): per-tile partial min/max of clamp(x, 0, 256).
# Each grid step writes its own (8, LANE) partial block -> "parallel" grid axis
# (both v7x TensorCores stream HBM). Final reduce of the tiny partials is XLA.
# ---------------------------------------------------------------------------
def _minmax_kernel(x_ref, min_ref, max_ref, *, total, tile_rows, lanes, padded):
    xc = jnp.clip(x_ref[...].astype(jnp.float32), 0.0, CLAMP_HI)
    if padded:
        row_off = pl.program_id(0) * tile_rows
        r = jax.lax.broadcasted_iota(jnp.int32, (tile_rows, lanes), 0)
        c = jax.lax.broadcasted_iota(jnp.int32, (tile_rows, lanes), 1)
        valid = ((row_off + r) * lanes + c) < total
        lo = jnp.where(valid, xc, jnp.inf)
        hi = jnp.where(valid, xc, -jnp.inf)
    else:
        lo = xc
        hi = xc
    # Sublane-only reduction per tile; write a lane-dense (8, LANE) block.
    tmin = jnp.min(lo, axis=0, keepdims=True)              # (1, LANE)
    tmax = jnp.max(hi, axis=0, keepdims=True)              # (1, LANE)
    min_ref[...] = jnp.broadcast_to(tmin, min_ref.shape)
    max_ref[...] = jnp.broadcast_to(tmax, max_ref.shape)


# ---------------------------------------------------------------------------
# Pass 2 (large tensors): elementwise fake-quant using SMEM scalars
# [a, b, s, inv_s]; multiply by exact reciprocal instead of per-element divide.
# ---------------------------------------------------------------------------
def _quantize_kernel(sc_ref, x_ref, o_ref):
    a = sc_ref[0]
    b = sc_ref[1]
    s = sc_ref[2]
    inv_s = sc_ref[3]
    xc = jnp.clip(x_ref[...].astype(jnp.float32), 0.0, CLAMP_HI)  # QReLU6 clamp
    xc = jnp.clip(xc, a, b)                                       # UniformQuantize clamp
    o_ref[...] = (jnp.round((xc - a) * inv_s) * s + a).astype(o_ref.dtype)


def qrelu6(x, *, lane_width=LANE):
    """Pallas implementation of QReLU6.forward (forward pass only)."""
    orig_shape = x.shape
    orig_dtype = x.dtype
    total = math.prod(orig_shape)
    itemsize = jnp.dtype(orig_dtype).itemsize

    flat = x.reshape(-1)
    rows_needed = pl.cdiv(total, lane_width)

    # ---- fused single-block path (small / medium activations) ----
    if rows_needed * lane_width * 4 <= FUSED_MAX_F32_BYTES:
        rows = rows_needed
        padded_total = rows * lane_width
        if padded_total != total:
            flat = jnp.pad(flat, (0, padded_total - total))
        x2 = flat.reshape(rows, lane_width)
        out = pl.pallas_call(
            functools.partial(_fused_kernel, total=total, rows=rows,
                              lanes=lane_width),
            out_shape=jax.ShapeDtypeStruct((rows, lane_width), orig_dtype),
            compiler_params=pltpu.CompilerParams(vmem_limit_bytes=VMEM_LIMIT),
        )(x2)
        return out.reshape(-1)[:total].reshape(orig_shape)

    # ---- two-pass path (large activations) ----
    # Block of ~TARGET_BLOCK_BYTES in the HBM dtype, rows a multiple of 8.
    tile_rows = max(8, (TARGET_BLOCK_BYTES // (lane_width * itemsize)) // 8 * 8)
    num_tiles = pl.cdiv(rows_needed, tile_rows)
    rows = num_tiles * tile_rows
    padded_total = rows * lane_width
    padded = padded_total != total
    if padded:
        flat = jnp.pad(flat, (0, padded_total - total))
    x2 = flat.reshape(rows, lane_width)

    # Pass 1: per-tile partial min/max (parallel across tiles / TensorCores).
    pmin, pmax = pl.pallas_call(
        functools.partial(_minmax_kernel, total=total, tile_rows=tile_rows,
                          lanes=lane_width, padded=padded),
        out_shape=(jax.ShapeDtypeStruct((num_tiles * 8, lane_width), jnp.float32),
                   jax.ShapeDtypeStruct((num_tiles * 8, lane_width), jnp.float32)),
        grid=(num_tiles,),
        in_specs=[pl.BlockSpec((tile_rows, lane_width), lambda i: (i, 0))],
        out_specs=(pl.BlockSpec((8, lane_width), lambda i: (i, 0)),
                   pl.BlockSpec((8, lane_width), lambda i: (i, 0))),
        compiler_params=pltpu.CompilerParams(
            dimension_semantics=("parallel",),
            vmem_limit_bytes=VMEM_LIMIT),
    )(x2)

    # Tiny final reduction + scalar math in plain XLA.
    a = jnp.min(pmin)
    b = jnp.max(pmax)
    s = jnp.maximum((b - a) / LEVEL, EPS)
    inv_s = 1.0 / s
    scalars = jnp.stack([a, b, s, inv_s]).astype(jnp.float32)

    # Pass 2: elementwise fake-quant, scalars live in SMEM.
    out = pl.pallas_call(
        _quantize_kernel,
        out_shape=jax.ShapeDtypeStruct((rows, lane_width), orig_dtype),
        grid=(num_tiles,),
        in_specs=[pl.BlockSpec(memory_space=pltpu.MemorySpace.SMEM),
                  pl.BlockSpec((tile_rows, lane_width), lambda i: (i, 0))],
        out_specs=pl.BlockSpec((tile_rows, lane_width), lambda i: (i, 0)),
        compiler_params=pltpu.CompilerParams(
            dimension_semantics=("parallel",),
            vmem_limit_bytes=VMEM_LIMIT),
    )(scalars, x2)

    return out.reshape(-1)[:total].reshape(orig_shape)


# ---------------------------------------------------------------------------
# Pure-JAX reference mirroring the PyTorch forward (uses the divide, like torch).
# ---------------------------------------------------------------------------
def _reference(x):
    xf = x.astype(jnp.float32)
    out = jnp.clip(xf, 0.0, CLAMP_HI)
    a = jnp.min(out)
    b = jnp.max(out)
    s = jnp.maximum((b - a) / LEVEL, EPS)
    q = jnp.round((jnp.clip(out, a, b) - a) / s) * s + a
    return q.astype(x.dtype), s


def _check(y, y_ref, s):
    y32 = y.astype(jnp.float32)
    r32 = y_ref.astype(jnp.float32)
    err = jnp.abs(y32 - r32)
    ok = err <= 1e-4 + 1e-4 * jnp.abs(r32)
    # Multiply-by-exact-reciprocal vs. divide can flip round-half-to-even ties
    # at quantization-bin boundaries by exactly one step `s`; allow those rare
    # measure-zero cases but nothing larger.
    tie = jnp.abs(err - s) <= 1e-3
    assert bool(jnp.all(ok | tie)), "mismatch larger than one quantization step"
    assert float(jnp.mean(jnp.logical_not(ok).astype(jnp.float32))) < 1e-3, \
        "too many quantization-boundary mismatches"


if __name__ == "__main__":
    key = jax.random.PRNGKey(0)
    k1, k2, k3 = jax.random.split(key, 3)

    cases = [
        # NCHW activations: batch=2, channels=4, spatial=16 -> fused path, no pad.
        jax.random.normal(k1, (2, 4, 16, 16), dtype=jnp.float32) * 3.0,
        # Odd shape -> fused path with padding + masked min/max.
        jax.random.normal(k2, (2, 3, 17, 19), dtype=jnp.float32) * 3.0,
        # Larger activation -> two-pass tiled path (parallel pass 1 + SMEM scalars).
        jax.random.normal(k3, (2, 4, 512, 512), dtype=jnp.float32) * 3.0,
    ]

    for x in cases:
        y = qrelu6(x)
        jax.block_until_ready(y)
        y_ref, s = _reference(x)
        assert y.shape == x.shape and y.dtype == x.dtype
        _check(y, y_ref, s)

    print("KERNEL_OK")
</pallas_src>

<mosaic_0001>
module attributes {stable_mosaic.version = 11 : i64} {
  func.func @_fused_kernel(%arg0: memref<4x512xf32, #tpu.memory_space<vmem>>, %arg1: memref<4x512xf32, #tpu.memory_space<vmem>>) attributes {dimension_semantics = [], scalar_prefetch = 0 : i64, scratch_operands = 0 : i64, tpu.core_type = #tpu.core_type<tc>} {
    %c0 = arith.constant 0 : index
    %c0_0 = arith.constant 0 : index
    %0 = vector.load %arg0[%c0, %c0_0] : memref<4x512xf32, #tpu.memory_space<vmem>>, vector<4x512xf32>
    %cst = arith.constant 0.000000e+00 : f32
    %cst_1 = arith.constant 2.560000e+02 : f32
    %1 = vector.broadcast %cst : f32 to vector<4x512xf32>
    %2 = arith.maximumf %1, %0 : vector<4x512xf32>
    %3 = vector.broadcast %cst_1 : f32 to vector<4x512xf32>
    %4 = arith.minimumf %3, %2 : vector<4x512xf32>
    %5 = vector.shape_cast %4 : vector<4x512xf32> to vector<1x4x512xf32>
    %cst_2 = arith.constant dense<0x7F800000> : vector<1xf32>
    %6 = vector.multi_reduction <minimumf>, %5, %cst_2 [1, 2] : vector<1x4x512xf32> to vector<1xf32>
    %7 = vector.shape_cast %6 : vector<1xf32> to vector<1x1x1xf32>
    %8 = vector.extract %7[0, 0, 0] : f32 from vector<1x1x1xf32>
    %9 = vector.shape_cast %4 : vector<4x512xf32> to vector<1x4x512xf32>
    %cst_3 = arith.constant dense<0xFF800000> : vector<1xf32>
    %10 = vector.multi_reduction <maximumf>, %9, %cst_3 [1, 2] : vector<1x4x512xf32> to vector<1xf32>
    %11 = vector.shape_cast %10 : vector<1xf32> to vector<1x1x1xf32>
    %12 = vector.extract %11[0, 0, 0] : f32 from vector<1x1x1xf32>
    %13 = arith.subf %12, %8 : f32
    %cst_4 = arith.constant 2.550000e+02 : f32
    %14 = arith.divf %13, %cst_4 : f32
    %cst_5 = arith.constant 9.99999993E-9 : f32
    %15 = arith.maximumf %14, %cst_5 : f32
    %cst_6 = arith.constant 1.000000e+00 : f32
    %16 = arith.divf %cst_6, %15 : f32
    %17 = vector.broadcast %8 : f32 to vector<4x512xf32>
    %18 = arith.maximumf %17, %4 : vector<4x512xf32>
    %19 = vector.broadcast %12 : f32 to vector<4x512xf32>
    %20 = arith.minimumf %19, %18 : vector<4x512xf32>
    %21 = vector.broadcast %8 : f32 to vector<4x512xf32>
    %22 = arith.subf %20, %21 : vector<4x512xf32>
    %23 = vector.broadcast %16 : f32 to vector<4x512xf32>
    %24 = arith.mulf %22, %23 : vector<4x512xf32>
    %25 = math.roundeven %24 : vector<4x512xf32>
    %26 = vector.broadcast %15 : f32 to vector<4x512xf32>
    %27 = arith.mulf %25, %26 : vector<4x512xf32>
    %28 = vector.broadcast %8 : f32 to vector<4x512xf32>
    %29 = arith.addf %27, %28 : vector<4x512xf32>
    %c0_7 = arith.constant 0 : index
    %c0_8 = arith.constant 0 : index
    %30 = vector.load %arg1[%c0_7, %c0_8] : memref<4x512xf32, #tpu.memory_space<vmem>>, vector<4x512xf32>
    tpu.vector_store %arg1[%c0_7, %c0_8], %29 {strides = array<i32>} : memref<4x512xf32, #tpu.memory_space<vmem>>, vector<4x512xf32>,
    return
  }
}

</mosaic_0001>

<llo_original>
// kernel: tpu_custom_call.1
$region0: #{tpu_custom_call.1}
  #allocation0 [shape = 'u32[]', space=smem, size = 0x4, offset = 0x4, fixed_abs, tag = 'smem constant byte address 0x4 - core index']
  #allocation1 [shape = 'u32[144,128]{1,0:T(1,128)}', space=vmem, size = 0x12000, scoped, tag = 'internal scratch']
  %s0 = inlined_call_operand.hbm [shape: f32[4,512], index: 0, kind: input, shape index: {}]
  %s1 = inlined_call_operand.hbm [shape: f32[4,512], index: 1, kind: output, shape index: {}]
  %s2 = sld [smem:[#allocation0]]
  $region18: #{tpu_custom_call.1} parent=0
    _
  %s4 = ssub.s32 1, %s2
  %s5 = scalar_select 0, %s4, %s2
  $region1: #{tpu_custom_call.1} parent=0
    #allocation2 [shape = 'u8[8192]{0}', space=vmem, size = 0x2000, scoped, tag = 'input window, operand 0, single buffered']
    #allocation3 [shape = 's32[1]{0}', space=sflag, size = 0x4, scoped, tag = 'scoped memory for tpu_custom_call.1']
    #allocation4 [shape = 's32[1]{0}', space=sflag, size = 0x4, scoped, tag = 'scoped memory for tpu_custom_call.1']
    #allocation5 [shape = 'u8[8192]{0}', space=vmem, size = 0x2000, scoped, tag = 'output window, operand 0, single buffered']
    %6 = vsyncpa [#allocation3], 0
    %7 = vsyncpa [#allocation4], 0
    // Predicated region
    $region2: #{tpu_custom_call.1} parent=1 // pred_check
      _
    $region3: #{tpu_custom_call.1} parent=1 // pred_check_branch
      %9 = sbr.rel (0) target = $region5
    $region4: #{tpu_custom_call.1} parent=1 // pred_region
      %s11 = ssub.s32 256, 256
      %12 = vsyncadd [#allocation3], %s11
      %s14 = sshll.u32 [#allocation2], 4
      %s15 = int_to_ptr.vmem [resolvable:$true] %s14
      %17 = dma.hbm_to_vmem [thread:$0]  %s0, 256, %s15, [#allocation3]
    $region5: #{tpu_custom_call.1} parent=1 // pred_fallthru
      _
    // Predicated region
    $region6: #{tpu_custom_call.1} parent=1 // pred_check
      _
    $region7: #{tpu_custom_call.1} parent=1 // pred_check_branch
      %19 = sbr.rel (0) target = $region9
    $region8: #{tpu_custom_call.1} parent=1 // pred_region
      %20 = dma.done [#allocation3], 256
    $region9: #{tpu_custom_call.1} parent=1 // pred_fallthru
      _
    %v21 = vld [vmem:[#allocation2] sm:$0xff]
    %v22 = vld [vmem:[#allocation2 + $0x8] sm:$0xff]
    %v23 = vmax.f32 %v21, 0.0
    %v24 = vmax.f32 %v22, 0.0
    %v25 = vmin.f32 %v23, 256.0
    %v26 = vmin.f32 %v24, 256.0
    %v29 = vcombine.high %v25, %v25
    %v30 = vcombine.high %v26, %v26
    %vm33 = vcmask 1043456
    %v34 = vsel %vm33, %v25, inf
    %v35 = vsel %vm33, %v29, inf
    %v36 = vsel %vm33, %v26, inf
    %v37 = vsel %vm33, %v30, inf
    %v38 = vmin.f32 %v34, %v35
    %v39 = vmin.f32 %v36, %v37
    %v40 = vmin.f32 %v38, %v39
    %41 = vmin.xlane.f32.xlu0 %v40
    %v42 = vpop.xlane.xlu0 %41
    %v43 = vrot.slane %v42, 4
    %v44 = vmin.f32 %v42, %v43
    %v45 = vrot.slane %v44, 2
    %v46 = vmin.f32 %v44, %v45
    %v47 = vrot.slane %v46, 1
    %v48 = vmin.f32 %v46, %v47
    %s49 = vtos %v48
    %v50 = vsel %vm33, %v25, -inf
    %v51 = vsel %vm33, %v29, -inf
    %v52 = vsel %vm33, %v26, -inf
    %v53 = vsel %vm33, %v30, -inf
    %v54 = vmax.f32 %v50, %v51
    %v55 = vmax.f32 %v52, %v53
    %v56 = vmax.f32 %v54, %v55
    %57 = vmax.xlane.f32.xlu0 %v56
    %v58 = vpop.xlane.xlu0 %57
    %v59 = vrot.slane %v58, 4
    %v60 = vmax.f32 %v58, %v59
    %v61 = vrot.slane %v60, 2
    %v62 = vmax.f32 %v60, %v61
    %v63 = vrot.slane %v62, 1
    %v64 = vmax.f32 %v62, %v63
    %s65 = vtos %v64
    %s66 = ssub.f32 %s65, %s49
    %v67 = vrcp.pop 255.0
    %s68 = vtos %v67
    %s69 = smul.f32 %s66, %s68
    %s70 = smax.f32 %s69, 1e-08
    %v71 = vstv %s70
    %v72 = vrcp.pop %v71
    %s73 = vtos %v72
    %v74 = vstv %s49
    %v75 = vmax.f32 %v74, %v25
    %v76 = vmax.f32 %v74, %v26
    %v77 = vstv %s65
    %v78 = vmin.f32 %v77, %v75
    %v79 = vmin.f32 %v77, %v76
    %v80 = vsub.f32 %v78, %v74
    %v81 = vsub.f32 %v79, %v74
    %v82 = vstv %s73
    %v83 = vmul.f32 %v80, %v82
    %v84 = vmul.f32 %v81, %v82
    %v85 = vround.ne.pseudo %v83
    %v86 = vround.ne.pseudo %v84
    %v87 = vstv %s70
    %v88 = vmul.f32 %v85, %v87
    %v89 = vmul.f32 %v86, %v87
    %v90 = vadd.f32 %v88, %v74
    %v91 = vadd.f32 %v89, %v74
    %92 = vst [vmem:[#allocation5] sm:$0xff] %v90
    %93 = vst [vmem:[#allocation5 + $0x8] sm:$0xff] %v91
    // Predicated region
    $region10: #{tpu_custom_call.1} parent=1 // pred_check
      _
    $region11: #{tpu_custom_call.1} parent=1 // pred_check_branch
      %95 = sbr.rel (0) target = $region13
    $region12: #{tpu_custom_call.1} parent=1 // pred_region
      %s97 = ssub.s32 256, 256
      %98 = vsyncadd [#allocation4], %s97
      %s100 = sshll.u32 [#allocation5], 4
      %s101 = int_to_ptr.vmem [resolvable:$true] %s100
      %103 = dma.vmem_to_hbm [thread:$0]  %s101, 256, %s1, [#allocation4]
    $region13: #{tpu_custom_call.1} parent=1 // pred_fallthru
      _
    // Predicated region
    $region14: #{tpu_custom_call.1} parent=1 // pred_check
      _
    $region15: #{tpu_custom_call.1} parent=1 // pred_check_branch
      %105 = sbr.rel (0) target = $region17
    $region16: #{tpu_custom_call.1} parent=1 // pred_region
      %106 = dma.done [#allocation4], 256
    $region17: #{tpu_custom_call.1} parent=1 // pred_fallthru
      _
    %107 = vsyncpa [#allocation3], 1
    %108 = vsyncpa [#allocation4], 1

</llo_original>
